<compile_context>
chip_gen: v6e
topology: v6e:2x2x1
jax: 0.10.0
libtpu: 0.0.40
codegen_flags: <defaults>
</compile_context>

<pallas_src>
import jax
import jax.numpy as jnp
from jax.experimental import pallas as pl
from jax.experimental.pallas import tpu as pltpu


def _slayer_wavg_kernel(pts_ref,    # VMEM (D, B_T, P) f32   points: P on lanes, B on sublanes
                        cnt_ref,    # VMEM (B_T, 1) int32     #valid (non-dummy) points per row
                        w_ref,      # SMEM (N*D,) f32         -(mult_sharpness * sharpness^2)
                        c_ref,      # SMEM (N*D,) f32         centers
                        avgw_ref,   # SMEM (N,)   f32         avg weights
                        out_ref):   # VMEM (B_T, N) f32
    D, B_T, P_T = pts_ref.shape
    N = avgw_ref.shape[0]

    # Regenerate the dummy-point mask from the per-row count (contiguous-prefix padding,
    # as produced by prepare_batch) -> no (B, P) mask stream from HBM.
    cnt = cnt_ref[...]                                            # (B_T, 1) int32
    lane = jax.lax.broadcasted_iota(jnp.int32, (B_T, P_T), 1)     # point index per lane
    valid = lane < cnt                                            # (B_T, P_T) bool
    inv_denom = 1.0 / jnp.maximum(cnt.astype(jnp.float32), 1.0)   # (B_T, 1), exact divide

    # Load each coordinate plane once; reused for every structure element.
    x = [pts_ref[d] for d in range(D)]                            # D x (B_T, P_T) f32

    neg_big = jnp.float32(-1e30)      # exp(-1e30) underflows to exactly 0 in f32
    for n in range(N):                # static unroll; n_elements is small
        # exponent acc[b,p] = sum_d w[n,d] * (x[b,p,d] - c[n,d])^2,  w = -(mult * s^2)
        acc = w_ref[n * D] * jnp.square(x[0] - c_ref[n * D])
        for d in range(1, D):
            acc = acc + w_ref[n * D + d] * jnp.square(x[d] - c_ref[n * D + d])
        e = jnp.exp(jnp.where(valid, acc, neg_big))               # (B_T, P_T) EUP pass
        num = jnp.sum(e, axis=1, keepdims=True)                   # (B_T, 1) lane reduce
        out_ref[:, n:n + 1] = avgw_ref[n] * num * inv_denom


# Conservative per-step tile budget: double-buffered points block (2*D planes) plus
# ~4 live (B_T, P) f32 intermediates. 24 MiB fits v7x's 64 MiB VMEM with headroom.
_TILE_VMEM_BUDGET = 24 * 1024 * 1024


def _choose_b_tile(B, D, P):
    bytes_per_row = P * 4 * (2 * D + 4)
    max_rows = max(1, _TILE_VMEM_BUDGET // bytes_per_row)
    cap = min(B, max_rows)
    if B >= 16:
        cap = min(cap, B // 2)        # keep >= 2 blocks on the parallel axis (v7x megacore)
    for bt in range(cap, 0, -1):
        # (8, 128) rule: second-to-last block dim must be a multiple of 8 or the full dim.
        if B % bt == 0 and (bt % 8 == 0 or bt == B):
            return bt
    if B % 8 == 0:
        return 8
    return B


@jax.jit
def slayer_weighted_avg(points, mask, centers, sharpness, mult_sharpness, avg_weights):
    """points: (B, P, D); mask: (B, P) binary with contiguous-prefix padding
    (as built by prepare_batch); centers/sharpness: (N, D);
    mult_sharpness/avg_weights: (N, 1). Returns (B, N) float32."""
    B, P, D = points.shape
    N = centers.shape[0]

    # ---- wrapper glue -----------------------------------------------------------
    # TODO(synk): produce points in (D, B, P) upstream to avoid this XLA transpose.
    pts_t = jnp.transpose(points.astype(jnp.float32), (2, 0, 1))            # (D, B, P)

    # Contiguous-prefix padding => the mask is fully described by a per-row count.
    counts = jnp.sum((mask > 0).astype(jnp.int32), axis=1).reshape(B, 1)    # (B, 1)

    # Fold -(mult_sharpness * sharpness^2) once; flat f32 parameter arrays for SMEM.
    w_flat = (-(mult_sharpness.reshape(N, 1).astype(jnp.float32)
                * jnp.square(sharpness.astype(jnp.float32)))).reshape(N * D)
    c_flat = centers.astype(jnp.float32).reshape(N * D)
    avgw = avg_weights.astype(jnp.float32).reshape(N)

    # ---- tiling: full P per block, B tiled from the VMEM budget ------------------
    B_T = _choose_b_tile(B, D, P)
    grid = (B // B_T,)

    return pl.pallas_call(
        _slayer_wavg_kernel,
        out_shape=jax.ShapeDtypeStruct((B, N), jnp.float32),
        grid=grid,
        in_specs=[
            pl.BlockSpec((D, B_T, P), lambda b: (0, b, 0)),                 # points
            pl.BlockSpec((B_T, 1), lambda b: (b, 0)),                       # valid counts
            pl.BlockSpec(memory_space=pltpu.MemorySpace.SMEM),              # folded weights
            pl.BlockSpec(memory_space=pltpu.MemorySpace.SMEM),              # centers
            pl.BlockSpec(memory_space=pltpu.MemorySpace.SMEM),              # avg weights
        ],
        out_specs=pl.BlockSpec((B_T, N), lambda b: (b, 0)),
        compiler_params=pltpu.CompilerParams(
            dimension_semantics=("parallel",),
            vmem_limit_bytes=48 * 1024 * 1024,
        ),
    )(pts_t, counts, w_flat, c_flat, avgw)


def _reference(points, mask, centers, sharpness, mult_sharpness, avg_weights):
    # Pure-JAX reference (same math, broadcast formulation).
    diff = centers[None, None, :, :] - points[:, :, None, :]                # (B,P,N,D)
    dist = jnp.sum((sharpness ** 2)[None, None] * diff ** 2, axis=-1)       # (B,P,N)
    e = jnp.exp(-mult_sharpness.reshape(1, 1, -1) * dist) * mask[:, :, None]
    num = e.sum(axis=1)                                                      # (B,N)
    denom = jnp.maximum(mask.sum(axis=1, keepdims=True), 1.0)                # (B,1)
    return avg_weights.reshape(1, -1) * num / denom


def _run_case(key, B, P, D, N):
    k_pts, k_centers, k_avgw, k_cnt = jax.random.split(key, 4)

    # Prepared batch: points padded with zeros, mask marks real (non-dummy) points
    # as a contiguous prefix (exactly what prepare_batch produces).
    points = jax.random.uniform(k_pts, (B, P, D), dtype=jnp.float32)
    n_valid = jax.random.randint(k_cnt, (B,), 1, P + 1)
    mask = (jnp.arange(P)[None, :] < n_valid[:, None]).astype(jnp.float32)   # (B, P)
    points = points * mask[:, :, None]                                       # dummies = 0

    # Deterministic parameter init mirroring __init__ shapes.
    centers = jax.random.uniform(k_centers, (N, D), dtype=jnp.float32)           # rand(N, D)
    sharpness = jnp.ones((N, D), dtype=jnp.float32) * 3.0                         # ones * 3
    mult_sharpness = jnp.ones((N, 1), dtype=jnp.float32) * 3.0                    # ones * 3
    avg_weights = jax.random.uniform(k_avgw, (N, 1), dtype=jnp.float32)           # rand(N, 1)

    out = slayer_weighted_avg(points, mask, centers, sharpness, mult_sharpness, avg_weights)
    out = jax.block_until_ready(out)
    ref = _reference(points, mask, centers, sharpness, mult_sharpness, avg_weights)
    assert out.shape == (B, N)
    assert jnp.allclose(out, ref, atol=1e-5, rtol=1e-5), (out, ref)


if __name__ == "__main__":
    key = jax.random.PRNGKey(0)
    k1, k2 = jax.random.split(key)
    # Small shapes consistent with the module: batches of persistence multisets padded
    # ("prepared") to max_points points of dimension 2; n_elements structure elements.
    _run_case(k1, B=2, P=384, D=2, N=8)     # single B block, full-P block
    _run_case(k2, B=16, P=256, D=2, N=10)   # two parallel B blocks (B_T=8), N not mult of 8
    print("KERNEL_OK")
</pallas_src>

<mosaic_0001>
module attributes {stable_mosaic.version = 11 : i64} {
  func.func @_slayer_wavg_kernel(%arg0: i32, %arg1: memref<2x2x384xf32, #tpu.memory_space<vmem>>, %arg2: memref<2x1xi32, #tpu.memory_space<vmem>>, %arg3: memref<16xf32, #tpu.memory_space<smem>>, %arg4: memref<16xf32, #tpu.memory_space<smem>>, %arg5: memref<8xf32, #tpu.memory_space<smem>>, %arg6: memref<2x8xf32, #tpu.memory_space<vmem>>) attributes {dimension_semantics = [#tpu.dimension_semantics<parallel>], iteration_bounds = array<i64: 1>, scalar_prefetch = 0 : i64, scratch_operands = 0 : i64, tpu.core_type = #tpu.core_type<tc>, window_params = [{transform_indices = @transform_0, window_bounds = array<i64: 2, 2, 384>}, {transform_indices = @transform_1, window_bounds = array<i64: 2, 1>}, {transform_indices = @transform_2, window_bounds = array<i64: 16>}, {transform_indices = @transform_3, window_bounds = array<i64: 16>}, {transform_indices = @transform_4, window_bounds = array<i64: 8>}, {transform_indices = @transform_5, window_bounds = array<i64: 2, 8>}]} {
    %c0 = arith.constant 0 : index
    %c0_0 = arith.constant 0 : index
    %0 = vector.load %arg2[%c0, %c0_0] : memref<2x1xi32, #tpu.memory_space<vmem>>, vector<2x1xi32>
    %1 = tpu.iota {dimensions = array<i32: 1>} : vector<2x384xi32>
    %2 = vector.broadcast %0 : vector<2x1xi32> to vector<2x384xi32>
    %3 = arith.cmpi slt, %1, %2 : vector<2x384xi32>
    %4 = arith.sitofp %0 : vector<2x1xi32> to vector<2x1xf32>
    %cst = arith.constant 1.000000e+00 : f32
    %5 = vector.broadcast %cst : f32 to vector<2x1xf32>
    %6 = arith.maximumf %4, %5 : vector<2x1xf32>
    %cst_1 = arith.constant 1.000000e+00 : f32
    %7 = vector.broadcast %cst_1 : f32 to vector<2x1xf32>
    %8 = arith.divf %7, %6 : vector<2x1xf32>
    %c0_2 = arith.constant 0 : index
    %c0_3 = arith.constant 0 : index
    %c0_4 = arith.constant 0 : index
    %9 = vector.load %arg1[%c0_2, %c0_3, %c0_4] : memref<2x2x384xf32, #tpu.memory_space<vmem>>, vector<1x2x384xf32>
    %10 = vector.shape_cast %9 : vector<1x2x384xf32> to vector<2x384xf32>
    %c1 = arith.constant 1 : index
    %c0_5 = arith.constant 0 : index
    %c0_6 = arith.constant 0 : index
    %11 = vector.load %arg1[%c1, %c0_5, %c0_6] : memref<2x2x384xf32, #tpu.memory_space<vmem>>, vector<1x2x384xf32>
    %12 = vector.shape_cast %11 : vector<1x2x384xf32> to vector<2x384xf32>
    %c0_7 = arith.constant 0 : index
    %13 = memref.load %arg3[%c0_7] : memref<16xf32, #tpu.memory_space<smem>>
    %c0_8 = arith.constant 0 : index
    %14 = memref.load %arg4[%c0_8] : memref<16xf32, #tpu.memory_space<smem>>
    %15 = vector.broadcast %14 : f32 to vector<2x384xf32>
    %16 = arith.subf %10, %15 : vector<2x384xf32>
    %17 = arith.mulf %16, %16 : vector<2x384xf32>
    %18 = vector.broadcast %13 : f32 to vector<2x384xf32>
    %19 = arith.mulf %18, %17 : vector<2x384xf32>
    %c1_9 = arith.constant 1 : index
    %20 = memref.load %arg3[%c1_9] : memref<16xf32, #tpu.memory_space<smem>>
    %c1_10 = arith.constant 1 : index
    %21 = memref.load %arg4[%c1_10] : memref<16xf32, #tpu.memory_space<smem>>
    %22 = vector.broadcast %21 : f32 to vector<2x384xf32>
    %23 = arith.subf %12, %22 : vector<2x384xf32>
    %24 = arith.mulf %23, %23 : vector<2x384xf32>
    %25 = vector.broadcast %20 : f32 to vector<2x384xf32>
    %26 = arith.mulf %25, %24 : vector<2x384xf32>
    %27 = arith.addf %19, %26 : vector<2x384xf32>
    %cst_11 = arith.constant -1.000000e+30 : f32
    %28 = vector.broadcast %cst_11 : f32 to vector<2x384xf32>
    %29 = arith.select %3, %27, %28 : vector<2x384xi1>, vector<2x384xf32>
    %30 = math.exp %29 : vector<2x384xf32>
    %cst_12 = arith.constant dense<0.000000e+00> : vector<2xf32>
    %31 = vector.multi_reduction <add>, %30, %cst_12 [1] : vector<2x384xf32> to vector<2xf32>
    %32 = vector.shape_cast %31 : vector<2xf32> to vector<2x1xf32>
    %c0_13 = arith.constant 0 : index
    %33 = memref.load %arg5[%c0_13] : memref<8xf32, #tpu.memory_space<smem>>
    %34 = vector.broadcast %33 : f32 to vector<2x1xf32>
    %35 = arith.mulf %34, %32 : vector<2x1xf32>
    %36 = arith.mulf %35, %8 : vector<2x1xf32>
    %c0_14 = arith.constant 0 : index
    %c0_15 = arith.constant 0 : index
    %37 = vector.load %arg6[%c0_14, %c0_15] : memref<2x8xf32, #tpu.memory_space<vmem>>, vector<2x1xf32>
    tpu.vector_store %arg6[%c0_14, %c0_15], %36 {strides = array<i32>} : memref<2x8xf32, #tpu.memory_space<vmem>>, vector<2x1xf32>,
    %c2 = arith.constant 2 : index
    %38 = memref.load %arg3[%c2] : memref<16xf32, #tpu.memory_space<smem>>
    %c2_16 = arith.constant 2 : index
    %39 = memref.load %arg4[%c2_16] : memref<16xf32, #tpu.memory_space<smem>>
    %40 = vector.broadcast %39 : f32 to vector<2x384xf32>
    %41 = arith.subf %10, %40 : vector<2x384xf32>
    %42 = arith.mulf %41, %41 : vector<2x384xf32>
    %43 = vector.broadcast %38 : f32 to vector<2x384xf32>
    %44 = arith.mulf %43, %42 : vector<2x384xf32>
    %c3 = arith.constant 3 : index
    %45 = memref.load %arg3[%c3] : memref<16xf32, #tpu.memory_space<smem>>
    %c3_17 = arith.constant 3 : index
    %46 = memref.load %arg4[%c3_17] : memref<16xf32, #tpu.memory_space<smem>>
    %47 = vector.broadcast %46 : f32 to vector<2x384xf32>
    %48 = arith.subf %12, %47 : vector<2x384xf32>
    %49 = arith.mulf %48, %48 : vector<2x384xf32>
    %50 = vector.broadcast %45 : f32 to vector<2x384xf32>
    %51 = arith.mulf %50, %49 : vector<2x384xf32>
    %52 = arith.addf %44, %51 : vector<2x384xf32>
    %cst_18 = arith.constant -1.000000e+30 : f32
    %53 = vector.broadcast %cst_18 : f32 to vector<2x384xf32>
    %54 = arith.select %3, %52, %53 : vector<2x384xi1>, vector<2x384xf32>
    %55 = math.exp %54 : vector<2x384xf32>
    %cst_19 = arith.constant dense<0.000000e+00> : vector<2xf32>
    %56 = vector.multi_reduction <add>, %55, %cst_19 [1] : vector<2x384xf32> to vector<2xf32>
    %57 = vector.shape_cast %56 : vector<2xf32> to vector<2x1xf32>
    %c1_20 = arith.constant 1 : index
    %58 = memref.load %arg5[%c1_20] : memref<8xf32, #tpu.memory_space<smem>>
    %59 = vector.broadcast %58 : f32 to vector<2x1xf32>
    %60 = arith.mulf %59, %57 : vector<2x1xf32>
    %61 = arith.mulf %60, %8 : vector<2x1xf32>
    %c0_21 = arith.constant 0 : index
    %c1_22 = arith.constant 1 : index
    %62 = vector.load %arg6[%c0_21, %c1_22] : memref<2x8xf32, #tpu.memory_space<vmem>>, vector<2x1xf32>
    tpu.vector_store %arg6[%c0_21, %c1_22], %61 {strides = array<i32>} : memref<2x8xf32, #tpu.memory_space<vmem>>, vector<2x1xf32>,
    %c4 = arith.constant 4 : index
    %63 = memref.load %arg3[%c4] : memref<16xf32, #tpu.memory_space<smem>>
    %c4_23 = arith.constant 4 : index
    %64 = memref.load %arg4[%c4_23] : memref<16xf32, #tpu.memory_space<smem>>
    %65 = vector.broadcast %64 : f32 to vector<2x384xf32>
    %66 = arith.subf %10, %65 : vector<2x384xf32>
    %67 = arith.mulf %66, %66 : vector<2x384xf32>
    %68 = vector.broadcast %63 : f32 to vector<2x384xf32>
    %69 = arith.mulf %68, %67 : vector<2x384xf32>
    %c5 = arith.constant 5 : index
    %70 = memref.load %arg3[%c5] : memref<16xf32, #tpu.memory_space<smem>>
    %c5_24 = arith.constant 5 : index
    %71 = memref.load %arg4[%c5_24] : memref<16xf32, #tpu.memory_space<smem>>
    %72 = vector.broadcast %71 : f32 to vector<2x384xf32>
    %73 = arith.subf %12, %72 : vector<2x384xf32>
    %74 = arith.mulf %73, %73 : vector<2x384xf32>
    %75 = vector.broadcast %70 : f32 to vector<2x384xf32>
    %76 = arith.mulf %75, %74 : vector<2x384xf32>
    %77 = arith.addf %69, %76 : vector<2x384xf32>
    %cst_25 = arith.constant -1.000000e+30 : f32
    %78 = vector.broadcast %cst_25 : f32 to vector<2x384xf32>
    %79 = arith.select %3, %77, %78 : vector<2x384xi1>, vector<2x384xf32>
    %80 = math.exp %79 : vector<2x384xf32>
    %cst_26 = arith.constant dense<0.000000e+00> : vector<2xf32>
    %81 = vector.multi_reduction <add>, %80, %cst_26 [1] : vector<2x384xf32> to vector<2xf32>
    %82 = vector.shape_cast %81 : vector<2xf32> to vector<2x1xf32>
    %c2_27 = arith.constant 2 : index
    %83 = memref.load %arg5[%c2_27] : memref<8xf32, #tpu.memory_space<smem>>
    %84 = vector.broadcast %83 : f32 to vector<2x1xf32>
    %85 = arith.mulf %84, %82 : vector<2x1xf32>
    %86 = arith.mulf %85, %8 : vector<2x1xf32>
    %c0_28 = arith.constant 0 : index
    %c2_29 = arith.constant 2 : index
    %87 = vector.load %arg6[%c0_28, %c2_29] : memref<2x8xf32, #tpu.memory_space<vmem>>, vector<2x1xf32>
    tpu.vector_store %arg6[%c0_28, %c2_29], %86 {strides = array<i32>} : memref<2x8xf32, #tpu.memory_space<vmem>>, vector<2x1xf32>,
    %c6 = arith.constant 6 : index
    %88 = memref.load %arg3[%c6] : memref<16xf32, #tpu.memory_space<smem>>
    %c6_30 = arith.constant 6 : index
    %89 = memref.load %arg4[%c6_30] : memref<16xf32, #tpu.memory_space<smem>>
    %90 = vector.broadcast %89 : f32 to vector<2x384xf32>
    %91 = arith.subf %10, %90 : vector<2x384xf32>
    %92 = arith.mulf %91, %91 : vector<2x384xf32>
    %93 = vector.broadcast %88 : f32 to vector<2x384xf32>
    %94 = arith.mulf %93, %92 : vector<2x384xf32>
    %c7 = arith.constant 7 : index
    %95 = memref.load %arg3[%c7] : memref<16xf32, #tpu.memory_space<smem>>
    %c7_31 = arith.constant 7 : index
    %96 = memref.load %arg4[%c7_31] : memref<16xf32, #tpu.memory_space<smem>>
    %97 = vector.broadcast %96 : f32 to vector<2x384xf32>
    %98 = arith.subf %12, %97 : vector<2x384xf32>
    %99 = arith.mulf %98, %98 : vector<2x384xf32>
    %100 = vector.broadcast %95 : f32 to vector<2x384xf32>
    %101 = arith.mulf %100, %99 : vector<2x384xf32>
    %102 = arith.addf %94, %101 : vector<2x384xf32>
    %cst_32 = arith.constant -1.000000e+30 : f32
    %103 = vector.broadcast %cst_32 : f32 to vector<2x384xf32>
    %104 = arith.select %3, %102, %103 : vector<2x384xi1>, vector<2x384xf32>
    %105 = math.exp %104 : vector<2x384xf32>
    %cst_33 = arith.constant dense<0.000000e+00> : vector<2xf32>
    %106 = vector.multi_reduction <add>, %105, %cst_33 [1] : vector<2x384xf32> to vector<2xf32>
    %107 = vector.shape_cast %106 : vector<2xf32> to vector<2x1xf32>
    %c3_34 = arith.constant 3 : index
    %108 = memref.load %arg5[%c3_34] : memref<8xf32, #tpu.memory_space<smem>>
    %109 = vector.broadcast %108 : f32 to vector<2x1xf32>
    %110 = arith.mulf %109, %107 : vector<2x1xf32>
    %111 = arith.mulf %110, %8 : vector<2x1xf32>
    %c0_35 = arith.constant 0 : index
    %c3_36 = arith.constant 3 : index
    %112 = vector.load %arg6[%c0_35, %c3_36] : memref<2x8xf32, #tpu.memory_space<vmem>>, vector<2x1xf32>
    tpu.vector_store %arg6[%c0_35, %c3_36], %111 {strides = array<i32>} : memref<2x8xf32, #tpu.memory_space<vmem>>, vector<2x1xf32>,
    %c8 = arith.constant 8 : index
    %113 = memref.load %arg3[%c8] : memref<16xf32, #tpu.memory_space<smem>>
    %c8_37 = arith.constant 8 : index
    %114 = memref.load %arg4[%c8_37] : memref<16xf32, #tpu.memory_space<smem>>
    %115 = vector.broadcast %114 : f32 to vector<2x384xf32>
    %116 = arith.subf %10, %115 : vector<2x384xf32>
    %117 = arith.mulf %116, %116 : vector<2x384xf32>
    %118 = vector.broadcast %113 : f32 to vector<2x384xf32>
    %119 = arith.mulf %118, %117 : vector<2x384xf32>
    %c9 = arith.constant 9 : index
    %120 = memref.load %arg3[%c9] : memref<16xf32, #tpu.memory_space<smem>>
    %c9_38 = arith.constant 9 : index
    %121 = memref.load %arg4[%c9_38] : memref<16xf32, #tpu.memory_space<smem>>
    %122 = vector.broadcast %121 : f32 to vector<2x384xf32>
    %123 = arith.subf %12, %122 : vector<2x384xf32>
    %124 = arith.mulf %123, %123 : vector<2x384xf32>
    %125 = vector.broadcast %120 : f32 to vector<2x384xf32>
    %126 = arith.mulf %125, %124 : vector<2x384xf32>
    %127 = arith.addf %119, %126 : vector<2x384xf32>
    %cst_39 = arith.constant -1.000000e+30 : f32
    %128 = vector.broadcast %cst_39 : f32 to vector<2x384xf32>
    %129 = arith.select %3, %127, %128 : vector<2x384xi1>, vector<2x384xf32>
    %130 = math.exp %129 : vector<2x384xf32>
    %cst_40 = arith.constant dense<0.000000e+00> : vector<2xf32>
    %131 = vector.multi_reduction <add>, %130, %cst_40 [1] : vector<2x384xf32> to vector<2xf32>
    %132 = vector.shape_cast %131 : vector<2xf32> to vector<2x1xf32>
    %c4_41 = arith.constant 4 : index
    %133 = memref.load %arg5[%c4_41] : memref<8xf32, #tpu.memory_space<smem>>
    %134 = vector.broadcast %133 : f32 to vector<2x1xf32>
    %135 = arith.mulf %134, %132 : vector<2x1xf32>
    %136 = arith.mulf %135, %8 : vector<2x1xf32>
    %c0_42 = arith.constant 0 : index
    %c4_43 = arith.constant 4 : index
    %137 = vector.load %arg6[%c0_42, %c4_43] : memref<2x8xf32, #tpu.memory_space<vmem>>, vector<2x1xf32>
    tpu.vector_store %arg6[%c0_42, %c4_43], %136 {strides = array<i32>} : memref<2x8xf32, #tpu.memory_space<vmem>>, vector<2x1xf32>,
    %c10 = arith.constant 10 : index
    %138 = memref.load %arg3[%c10] : memref<16xf32, #tpu.memory_space<smem>>
    %c10_44 = arith.constant 10 : index
    %139 = memref.load %arg4[%c10_44] : memref<16xf32, #tpu.memory_space<smem>>
    %140 = vector.broadcast %139 : f32 to vector<2x384xf32>
    %141 = arith.subf %10, %140 : vector<2x384xf32>
    %142 = arith.mulf %141, %141 : vector<2x384xf32>
    %143 = vector.broadcast %138 : f32 to vector<2x384xf32>
    %144 = arith.mulf %143, %142 : vector<2x384xf32>
    %c11 = arith.constant 11 : index
    %145 = memref.load %arg3[%c11] : memref<16xf32, #tpu.memory_space<smem>>
    %c11_45 = arith.constant 11 : index
    %146 = memref.load %arg4[%c11_45] : memref<16xf32, #tpu.memory_space<smem>>
    %147 = vector.broadcast %146 : f32 to vector<2x384xf32>
    %148 = arith.subf %12, %147 : vector<2x384xf32>
    %149 = arith.mulf %148, %148 : vector<2x384xf32>
    %150 = vector.broadcast %145 : f32 to vector<2x384xf32>
    %151 = arith.mulf %150, %149 : vector<2x384xf32>
    %152 = arith.addf %144, %151 : vector<2x384xf32>
    %cst_46 = arith.constant -1.000000e+30 : f32
    %153 = vector.broadcast %cst_46 : f32 to vector<2x384xf32>
    %154 = arith.select %3, %152, %153 : vector<2x384xi1>, vector<2x384xf32>
    %155 = math.exp %154 : vector<2x384xf32>
    %cst_47 = arith.constant dense<0.000000e+00> : vector<2xf32>
    %156 = vector.multi_reduction <add>, %155, %cst_47 [1] : vector<2x384xf32> to vector<2xf32>
    %157 = vector.shape_cast %156 : vector<2xf32> to vector<2x1xf32>
    %c5_48 = arith.constant 5 : index
    %158 = memref.load %arg5[%c5_48] : memref<8xf32, #tpu.memory_space<smem>>
    %159 = vector.broadcast %158 : f32 to vector<2x1xf32>
    %160 = arith.mulf %159, %157 : vector<2x1xf32>
    %161 = arith.mulf %160, %8 : vector<2x1xf32>
    %c0_49 = arith.constant 0 : index
    %c5_50 = arith.constant 5 : index
    %162 = vector.load %arg6[%c0_49, %c5_50] : memref<2x8xf32, #tpu.memory_space<vmem>>, vector<2x1xf32>
    tpu.vector_store %arg6[%c0_49, %c5_50], %161 {strides = array<i32>} : memref<2x8xf32, #tpu.memory_space<vmem>>, vector<2x1xf32>,
    %c12 = arith.constant 12 : index
    %163 = memref.load %arg3[%c12] : memref<16xf32, #tpu.memory_space<smem>>
    %c12_51 = arith.constant 12 : index
    %164 = memref.load %arg4[%c12_51] : memref<16xf32, #tpu.memory_space<smem>>
    %165 = vector.broadcast %164 : f32 to vector<2x384xf32>
    %166 = arith.subf %10, %165 : vector<2x384xf32>
    %167 = arith.mulf %166, %166 : vector<2x384xf32>
    %168 = vector.broadcast %163 : f32 to vector<2x384xf32>
    %169 = arith.mulf %168, %167 : vector<2x384xf32>
    %c13 = arith.constant 13 : index
    %170 = memref.load %arg3[%c13] : memref<16xf32, #tpu.memory_space<smem>>
    %c13_52 = arith.constant 13 : index
    %171 = memref.load %arg4[%c13_52] : memref<16xf32, #tpu.memory_space<smem>>
    %172 = vector.broadcast %171 : f32 to vector<2x384xf32>
    %173 = arith.subf %12, %172 : vector<2x384xf32>
    %174 = arith.mulf %173, %173 : vector<2x384xf32>
    %175 = vector.broadcast %170 : f32 to vector<2x384xf32>
    %176 = arith.mulf %175, %174 : vector<2x384xf32>
    %177 = arith.addf %169, %176 : vector<2x384xf32>
    %cst_53 = arith.constant -1.000000e+30 : f32
    %178 = vector.broadcast %cst_53 : f32 to vector<2x384xf32>
    %179 = arith.select %3, %177, %178 : vector<2x384xi1>, vector<2x384xf32>
    %180 = math.exp %179 : vector<2x384xf32>
    %cst_54 = arith.constant dense<0.000000e+00> : vector<2xf32>
    %181 = vector.multi_reduction <add>, %180, %cst_54 [1] : vector<2x384xf32> to vector<2xf32>
    %182 = vector.shape_cast %181 : vector<2xf32> to vector<2x1xf32>
    %c6_55 = arith.constant 6 : index
    %183 = memref.load %arg5[%c6_55] : memref<8xf32, #tpu.memory_space<smem>>
    %184 = vector.broadcast %183 : f32 to vector<2x1xf32>
    %185 = arith.mulf %184, %182 : vector<2x1xf32>
    %186 = arith.mulf %185, %8 : vector<2x1xf32>
    %c0_56 = arith.constant 0 : index
    %c6_57 = arith.constant 6 : index
    %187 = vector.load %arg6[%c0_56, %c6_57] : memref<2x8xf32, #tpu.memory_space<vmem>>, vector<2x1xf32>
    tpu.vector_store %arg6[%c0_56, %c6_57], %186 {strides = array<i32>} : memref<2x8xf32, #tpu.memory_space<vmem>>, vector<2x1xf32>,
    %c14 = arith.constant 14 : index
    %188 = memref.load %arg3[%c14] : memref<16xf32, #tpu.memory_space<smem>>
    %c14_58 = arith.constant 14 : index
    %189 = memref.load %arg4[%c14_58] : memref<16xf32, #tpu.memory_space<smem>>
    %190 = vector.broadcast %189 : f32 to vector<2x384xf32>
    %191 = arith.subf %10, %190 : vector<2x384xf32>
    %192 = arith.mulf %191, %191 : vector<2x384xf32>
    %193 = vector.broadcast %188 : f32 to vector<2x384xf32>
    %194 = arith.mulf %193, %192 : vector<2x384xf32>
    %c15 = arith.constant 15 : index
    %195 = memref.load %arg3[%c15] : memref<16xf32, #tpu.memory_space<smem>>
    %c15_59 = arith.constant 15 : index
    %196 = memref.load %arg4[%c15_59] : memref<16xf32, #tpu.memory_space<smem>>
    %197 = vector.broadcast %196 : f32 to vector<2x384xf32>
    %198 = arith.subf %12, %197 : vector<2x384xf32>
    %199 = arith.mulf %198, %198 : vector<2x384xf32>
    %200 = vector.broadcast %195 : f32 to vector<2x384xf32>
    %201 = arith.mulf %200, %199 : vector<2x384xf32>
    %202 = arith.addf %194, %201 : vector<2x384xf32>
    %cst_60 = arith.constant -1.000000e+30 : f32
    %203 = vector.broadcast %cst_60 : f32 to vector<2x384xf32>
    %204 = arith.select %3, %202, %203 : vector<2x384xi1>, vector<2x384xf32>
    %205 = math.exp %204 : vector<2x384xf32>
    %cst_61 = arith.constant dense<0.000000e+00> : vector<2xf32>
    %206 = vector.multi_reduction <add>, %205, %cst_61 [1] : vector<2x384xf32> to vector<2xf32>
    %207 = vector.shape_cast %206 : vector<2xf32> to vector<2x1xf32>
    %c7_62 = arith.constant 7 : index
    %208 = memref.load %arg5[%c7_62] : memref<8xf32, #tpu.memory_space<smem>>
    %209 = vector.broadcast %208 : f32 to vector<2x1xf32>
    %210 = arith.mulf %209, %207 : vector<2x1xf32>
    %211 = arith.mulf %210, %8 : vector<2x1xf32>
    %c0_63 = arith.constant 0 : index
    %c7_64 = arith.constant 7 : index
    %212 = vector.load %arg6[%c0_63, %c7_64] : memref<2x8xf32, #tpu.memory_space<vmem>>, vector<2x1xf32>
    tpu.vector_store %arg6[%c0_63, %c7_64], %211 {strides = array<i32>} : memref<2x8xf32, #tpu.memory_space<vmem>>, vector<2x1xf32>,
    return
  }
  func.func @transform_0(%arg0: i32) -> (i32, i32, i32) {
    %c0_i32 = arith.constant 0 : i32
    %c0_i32_0 = arith.constant 0 : i32
    %c0_i32_1 = arith.constant 0 : i32
    return %c0_i32, %arg0, %c0_i32_0 : i32, i32, i32
  }
  func.func @transform_1(%arg0: i32) -> (i32, i32) {
    %c0_i32 = arith.constant 0 : i32
    %c0_i32_0 = arith.constant 0 : i32
    return %arg0, %c0_i32 : i32, i32
  }
  func.func @transform_2(%arg0: i32) -> i32 {
    %c0_i32 = arith.constant 0 : i32
    %c0_i32_0 = arith.constant 0 : i32
    return %c0_i32 : i32
  }
  func.func @transform_3(%arg0: i32) -> i32 {
    %c0_i32 = arith.constant 0 : i32
    %c0_i32_0 = arith.constant 0 : i32
    return %c0_i32 : i32
  }
  func.func @transform_4(%arg0: i32) -> i32 {
    %c0_i32 = arith.constant 0 : i32
    %c0_i32_0 = arith.constant 0 : i32
    return %c0_i32 : i32
  }
  func.func @transform_5(%arg0: i32) -> (i32, i32) {
    %c0_i32 = arith.constant 0 : i32
    %c0_i32_0 = arith.constant 0 : i32
    return %arg0, %c0_i32 : i32, i32
  }
}

</mosaic_0001>

<llo_original>
// kernel: slayer_weighted_avg.1
$region0: #{slayer_weighted_avg.1}
  #allocation0 [shape = 'u32[]', space=smem, size = 0x4, offset = 0x4, fixed_abs, tag = 'smem constant byte address 0x4 - core index']
  #allocation1 [shape = 'u32[144,128]{1,0:T(1,128)}', space=vmem, size = 0x12000, scoped, tag = 'internal scratch']
  %s0 = inlined_call_operand.vmem [shape: f32[2,2,384], index: 0, kind: input, shape index: {}]
  %s1 = inlined_call_operand.vmem [shape: s32[2,1], index: 1, kind: input, shape index: {}]
  %s2 = inlined_call_operand.vmem [shape: f32[16], index: 2, kind: input, shape index: {}]
  %s3 = inlined_call_operand.vmem [shape: f32[16], index: 3, kind: input, shape index: {}]
  %s4 = inlined_call_operand.vmem [shape: f32[8], index: 4, kind: input, shape index: {}]
  %s5 = inlined_call_operand.hbm [shape: f32[2,8], index: 5, kind: output, shape index: {}]
  %s6 = sld [smem:[#allocation0]]
  $region42: #{slayer_weighted_avg.1} parent=0
    _
  %s8 = ssub.s32 1, %s6
  %s9 = scalar_select 0, %s8, %s6
  $region1: #{slayer_weighted_avg.1} parent=0
    #allocation2 [shape = 'u8[512]{0}', space=smem, size = 0x200, scoped, tag = 'input window, operand 2, single buffered']
    #allocation3 [shape = 's32[1]{0}', space=sflag, size = 0x4, scoped, tag = 'scoped memory for slayer_weighted_avg.1']
    #allocation4 [shape = 's32[1]{0}', space=sflag, size = 0x4, scoped, tag = 'scoped memory for slayer_weighted_avg.1']
    #allocation5 [shape = 'u8[512]{0}', space=smem, size = 0x200, scoped, tag = 'input window, operand 3, single buffered']
    #allocation6 [shape = 's32[1]{0}', space=sflag, size = 0x4, scoped, tag = 'scoped memory for slayer_weighted_avg.1']
    #allocation7 [shape = 'u8[512]{0}', space=smem, size = 0x200, scoped, tag = 'input window, operand 4, single buffered']
    #allocation8 [shape = 'u8[1024]{0}', space=vmem, size = 0x400, scoped, tag = 'output window, operand 0, single buffered']
    %10 = vsyncpa [#allocation4], 0
    %11 = vsyncpa [#allocation6], 0
    %12 = vsyncpa [#allocation3], 0
    // Predicated region
    $region2: #{slayer_weighted_avg.1} parent=1 // pred_check
      _
    $region3: #{slayer_weighted_avg.1} parent=1 // pred_check_branch
      %14 = sbr.rel (0) target = $region5
    $region4: #{slayer_weighted_avg.1} parent=1 // pred_region
      _
    $region5: #{slayer_weighted_avg.1} parent=1 // pred_fallthru
      _
    // Predicated region
    $region6: #{slayer_weighted_avg.1} parent=1 // pred_check
      _
    $region7: #{slayer_weighted_avg.1} parent=1 // pred_check_branch
      %16 = sbr.rel (0) target = $region9
    $region8: #{slayer_weighted_avg.1} parent=1 // pred_region
      _
    $region9: #{slayer_weighted_avg.1} parent=1 // pred_fallthru
      _
    // Predicated region
    $region10: #{slayer_weighted_avg.1} parent=1 // pred_check
      _
    $region11: #{slayer_weighted_avg.1} parent=1 // pred_check_branch
      %18 = sbr.rel (0) target = $region13
    $region12: #{slayer_weighted_avg.1} parent=1 // pred_region
      %s20 = ssub.s32 16, 16
      %21 = vsyncadd [#allocation4], %s20
      %s23 = sshll.u32 %s2, 4
      %s24 = int_to_ptr.vmem [resolvable:$true] %s23
      %26 = dma.vmem_to_smem %s24, 16, [#allocation2], [#allocation4]
    $region13: #{slayer_weighted_avg.1} parent=1 // pred_fallthru
      _
    // Predicated region
    $region14: #{slayer_weighted_avg.1} parent=1 // pred_check
      _
    $region15: #{slayer_weighted_avg.1} parent=1 // pred_check_branch
      %28 = sbr.rel (0) target = $region17
    $region16: #{slayer_weighted_avg.1} parent=1 // pred_region
      %s30 = ssub.s32 16, 16
      %31 = vsyncadd [#allocation6], %s30
      %s33 = sshll.u32 %s3, 4
      %s34 = int_to_ptr.vmem [resolvable:$true] %s33
      %36 = dma.vmem_to_smem %s34, 16, [#allocation5], [#allocation6]
    $region17: #{slayer_weighted_avg.1} parent=1 // pred_fallthru
      _
    // Predicated region
    $region18: #{slayer_weighted_avg.1} parent=1 // pred_check
      _
    $region19: #{slayer_weighted_avg.1} parent=1 // pred_check_branch
      %38 = sbr.rel (0) target = $region21
    $region20: #{slayer_weighted_avg.1} parent=1 // pred_region
      %s40 = ssub.s32 16, 16
      %41 = vsyncadd [#allocation6], %s40
      %s43 = sshll.u32 %s4, 4
      %s44 = int_to_ptr.vmem [resolvable:$true] %s43
      %46 = dma.vmem_to_smem %s44, 16, [#allocation7], [#allocation6]
    $region21: #{slayer_weighted_avg.1} parent=1 // pred_fallthru
      _
    // Predicated region
    $region22: #{slayer_weighted_avg.1} parent=1 // pred_check
      _
    $region23: #{slayer_weighted_avg.1} parent=1 // pred_check_branch
      %48 = sbr.rel (0) target = $region25
    $region24: #{slayer_weighted_avg.1} parent=1 // pred_region
      %49 = dma.done [#allocation4], 16
    $region25: #{slayer_weighted_avg.1} parent=1 // pred_fallthru
      _
    // Predicated region
    $region26: #{slayer_weighted_avg.1} parent=1 // pred_check
      _
    $region27: #{slayer_weighted_avg.1} parent=1 // pred_check_branch
      %51 = sbr.rel (0) target = $region29
    $region28: #{slayer_weighted_avg.1} parent=1 // pred_region
      %52 = dma.done [#allocation6], 16
    $region29: #{slayer_weighted_avg.1} parent=1 // pred_fallthru
      _
    // Predicated region
    $region30: #{slayer_weighted_avg.1} parent=1 // pred_check
      _
    $region31: #{slayer_weighted_avg.1} parent=1 // pred_check_branch
      %54 = sbr.rel (0) target = $region33
    $region32: #{slayer_weighted_avg.1} parent=1 // pred_region
      %55 = dma.done [#allocation6], 16
    $region33: #{slayer_weighted_avg.1} parent=1 // pred_fallthru
      _
    %56 = sfence
    %v57 = vld [vmem:[%s1] sm:$0x3]
    %v58 = vlaneseq
    %v59 = vand.u32 %v58, 127
    %v60 = vadd.s32 %v59, 128
    %v61 = vadd.s32 %v59, 256
    %62 = vset.pattern.permute.xlu0 0
    %63 = vperm.xlu0 %62, %v57
    %v64 = vpop.permute.xlu0 %63
    %vm65 = vcmp.lt.s32.totalorder %v59, %v64
    %vm66 = vcmp.lt.s32.totalorder %v60, %v64
    %vm67 = vcmp.lt.s32.totalorder %v61, %v64
    %v68 = vcvt.s32.f32 %v57
    %v69 = vmax.f32 %v68, 1.0
    %v70 = vrcp.pop %v69
    %v71 = vmul.f32 1.0, %v70
    %v72 = vld [vmem:[%s0] sm:$0x3f]
    %s73 = scalar_lea.vmem %s0, 6
    %v74 = vld [vmem:[%s73] sm:$0x3f]
    %s75 = sld [smem:[#allocation2]]
    %s76 = sld [smem:[#allocation5]]
    %v77 = vstv %s76
    %v78 = vsub.f32 %v72, %v77
    %v79 = vmul.f32 %v78, %v78
    %v80 = vstv %s75
    %v81 = vmul.f32 %v80, %v79
    %s82 = sld [smem:[#allocation2 + $0x1]]
    %s83 = sld [smem:[#allocation5 + $0x1]]
    %v84 = vstv %s83
    %v85 = vsub.f32 %v74, %v84
    %v86 = vmul.f32 %v85, %v85
    %v87 = vstv %s82
    %v88 = vmul.f32 %v87, %v86
    %v89 = vadd.f32 %v81, %v88
    %v91 = vcombine.high %v89, %v89
    %v93 = vunpack.c.l.s4 1983009808
    %v94 = vunpack.c.0.s8 %v93
    %v95 = vlaneseq
    %v96 = vshrl.u32 %v95, 7
    %v97 = vsub.s32 %v94, %v96
    %v98 = vrot.slane %v89, %v97
    %v100 = vunpack.c.l.s4 1983009808
    %v101 = vunpack.c.0.s8 %v100
    %v102 = vlaneseq
    %v103 = vshrl.u32 %v102, 7
    %v104 = vsub.s32 %v101, %v103
    %v105 = vrot.slane %v91, %v104
    %v106 = vcombine.high %v98, %v98
    %v110 = vsel %vm65, %v98, -1e+30
    %v111 = vsel %vm66, %v106, -1e+30
    %v112 = vsel %vm67, %v105, -1e+30
    %v113 = vmul.f32 %v110, 1.442695
    %v114 = vpow.pop %v113
    %v115 = vmul.f32 %v111, 1.442695
    %v116 = vpow.pop %v115
    %v117 = vmul.f32 %v112, 1.442695
    %v118 = vpow.pop %v117
    %vm119 = vcmask 1041408
    %v120 = vsel %vm119, %v114, 0.0
    %v121 = vsel %vm119, %v116, 0.0
    %v122 = vadd.f32 %v120, %v121
    %v123 = vsel %vm119, %v118, 0.0
    %v124 = vadd.f32 %v122, %v123
    %125 = vadd.xlane.f32.xlu0 %v124
    %v126 = vpop.xlane.xlu0 %125
    %s127 = sld [smem:[#allocation7]]
    %v128 = vstv %s127
    %v129 = vmul.f32 %v128, %v126
    %v130 = vmul.f32 %v129, %v71
    %vm131 = vcmask 1024
    %132 = vst.msk [vmem:[#allocation8] sm:$0x3] %vm131, %v130
    %s133 = sld [smem:[#allocation2 + $0x2]]
    %s134 = sld [smem:[#allocation5 + $0x2]]
    %v135 = vstv %s134
    %v136 = vsub.f32 %v72, %v135
    %v137 = vmul.f32 %v136, %v136
    %v138 = vstv %s133
    %v139 = vmul.f32 %v138, %v137
    %s140 = sld [smem:[#allocation2 + $0x3]]
    %s141 = sld [smem:[#allocation5 + $0x3]]
    %v142 = vstv %s141
    %v143 = vsub.f32 %v74, %v142
    %v144 = vmul.f32 %v143, %v143
    %v145 = vstv %s140
    %v146 = vmul.f32 %v145, %v144
    %v147 = vadd.f32 %v139, %v146
    %v149 = vcombine.high %v147, %v147
    %v151 = vunpack.c.l.s4 1983009808
    %v152 = vunpack.c.0.s8 %v151
    %v153 = vlaneseq
    %v154 = vshrl.u32 %v153, 7
    %v155 = vsub.s32 %v152, %v154
    %v156 = vrot.slane %v147, %v155
    %v158 = vunpack.c.l.s4 1983009808
    %v159 = vunpack.c.0.s8 %v158
    %v160 = vlaneseq
    %v161 = vshrl.u32 %v160, 7
    %v162 = vsub.s32 %v159, %v161
    %v163 = vrot.slane %v149, %v162
    %v164 = vcombine.high %v156, %v156
    %v168 = vsel %vm65, %v156, -1e+30
    %v169 = vsel %vm66, %v164, -1e+30
    %v170 = vsel %vm67, %v163, -1e+30
    %v171 = vmul.f32 %v168, 1.442695
    %v172 = vpow.pop %v171
    %v173 = vmul.f32 %v169, 1.442695
    %v174 = vpow.pop %v173
    %v175 = vmul.f32 %v170, 1.442695
    %v176 = vpow.pop %v175
    %v177 = vsel %vm119, %v172, 0.0
    %v178 = vsel %vm119, %v174, 0.0
    %v179 = vadd.f32 %v177, %v178
    %v180 = vsel %vm119, %v176, 0.0
    %v181 = vadd.f32 %v179, %v180
    %182 = vadd.xlane.f32.xlu0 %v181
    %v183 = vpop.xlane.xlu0 %182
    %s184 = sld [smem:[#allocation7 + $0x1]]
    %v185 = vstv %s184
    %v186 = vmul.f32 %v185, %v183
    %v187 = vmul.f32 %v186, %v71
    %189 = vrot.lane.b32.xlu0 %v187, 1
    %v190 = vpop.permute.xlu0 %189
    %vm192 = vcmask 9224
    %193 = vst.msk [vmem:[#allocation8] sm:$0x3] %vm192, %v190
    %s194 = sld [smem:[#allocation2 + $0x4]]
    %s195 = sld [smem:[#allocation5 + $0x4]]
    %v196 = vstv %s195
    %v197 = vsub.f32 %v72, %v196
    %v198 = vmul.f32 %v197, %v197
    %v199 = vstv %s194
    %v200 = vmul.f32 %v199, %v198
    %s201 = sld [smem:[#allocation2 + $0x5]]
    %s202 = sld [smem:[#allocation5 + $0x5]]
    %v203 = vstv %s202
    %v204 = vsub.f32 %v74, %v203
    %v205 = vmul.f32 %v204, %v204
    %v206 = vstv %s201
    %v207 = vmul.f32 %v206, %v205
    %v208 = vadd.f32 %v200, %v207
    %v210 = vcombine.high %v208, %v208
    %v212 = vunpack.c.l.s4 1983009808
    %v213 = vunpack.c.0.s8 %v212
    %v214 = vlaneseq
    %v215 = vshrl.u32 %v214, 7
    %v216 = vsub.s32 %v213, %v215
    %v217 = vrot.slane %v208, %v216
    %v219 = vunpack.c.l.s4 1983009808
    %v220 = vunpack.c.0.s8 %v219
    %v221 = vlaneseq
    %v222 = vshrl.u32 %v221, 7
    %v223 = vsub.s32 %v220, %v222
    %v224 = vrot.slane %v210, %v223
    %v225 = vcombine.high %v217, %v217
    %v229 = vsel %vm65, %v217, -1e+30
    %v230 = vsel %vm66, %v225, -1e+30
    %v231 = vsel %vm67, %v224, -1e+30
    %v232 = vmul.f32 %v229, 1.442695
    %v233 = vpow.pop %v232
    %v234 = vmul.f32 %v230, 1.442695
    %v235 = vpow.pop %v234
    %v236 = vmul.f32 %v231, 1.442695
    %v237 = vpow.pop %v236
    %v238 = vsel %vm119, %v233, 0.0
    %v239 = vsel %vm119, %v235, 0.0
    %v240 = vadd.f32 %v238, %v239
    %v241 = vsel %vm119, %v237, 0.0
    %v242 = vadd.f32 %v240, %v241
    %243 = vadd.xlane.f32.xlu0 %v242
    %v244 = vpop.xlane.xlu0 %243
    %s245 = sld [smem:[#allocation7 + $0x2]]
    %v246 = vstv %s245
    %v247 = vmul.f32 %v246, %v244
    %v248 = vmul.f32 %v247, %v71
    %250 = vrot.lane.b32.xlu0 %v248, 2
    %v251 = vpop.permute.xlu0 %250
    %vm253 = vcmask 17424
    %254 = vst.msk [vmem:[#allocation8] sm:$0x3] %vm253, %v251
    %s255 = sld [smem:[#allocation2 + $0x6]]
    %s256 = sld [smem:[#allocation5 + $0x6]]
    %v257 = vstv %s256
    %v258 = vsub.f32 %v72, %v257
    %v259 = vmul.f32 %v258, %v258
    %v260 = vstv %s255
    %v261 = vmul.f32 %v260, %v259
    %s262 = sld [smem:[#allocation2 + $0x7]]
    %s263 = sld [smem:[#allocation5 + $0x7]]
    %v264 = vstv %s263
    %v265 = vsub.f32 %v74, %v264
    %v266 = vmul.f32 %v265, %v265
    %v267 = vstv %s262
    %v268 = vmul.f32 %v267, %v266
    %v269 = vadd.f32 %v261, %v268
    %v271 = vcombine.high %v269, %v269
    %v273 = vunpack.c.l.s4 1983009808
    %v274 = vunpack.c.0.s8 %v273
    %v275 = vlaneseq
    %v276 = vshrl.u32 %v275, 7
    %v277 = vsub.s32 %v274, %v276
    %v278 = vrot.slane %v269, %v277
    %v280 = vunpack.c.l.s4 1983009808
    %v281 = vunpack.c.0.s8 %v280
    %v282 = vlaneseq
    %v283 = vshrl.u32 %v282, 7
    %v284 = vsub.s32 %v281, %v283
    %v285 = vrot.slane %v271, %v284
    %v286 = vcombine.high %v278, %v278
    %v290 = vsel %vm65, %v278, -1e+30
    %v291 = vsel %vm66, %v286, -1e+30
    %v292 = vsel %vm67, %v285, -1e+30
    %v293 = vmul.f32 %v290, 1.442695
    %v294 = vpow.pop %v293
    %v295 = vmul.f32 %v291, 1.442695
    %v296 = vpow.pop %v295
    %v297 = vmul.f32 %v292, 1.442695
    %v298 = vpow.pop %v297
    %v299 = vsel %vm119, %v294, 0.0
    %v300 = vsel %vm119, %v296, 0.0
    %v301 = vadd.f32 %v299, %v300
    %v302 = vsel %vm119, %v298, 0.0
    %v303 = vadd.f32 %v301, %v302
    %304 = vadd.xlane.f32.xlu0 %v303
    %v305 = vpop.xlane.xlu0 %304
    %s306 = sld [smem:[#allocation7 + $0x3]]
    %v307 = vstv %s306
    %v308 = vmul.f32 %v307, %v305
    %v309 = vmul.f32 %v308, %v71
    %311 = vrot.lane.b32.xlu0 %v309, 3
    %v312 = vpop.permute.xlu0 %311
    %vm314 = vcmask 25624
    %315 = vst.msk [vmem:[#allocation8] sm:$0x3] %vm314, %v312
    %s316 = sld [smem:[#allocation2 + $0x8]]
    %s317 = sld [smem:[#allocation5 + $0x8]]
    %v318 = vstv %s317
    %v319 = vsub.f32 %v72, %v318
    %v320 = vmul.f32 %v319, %v319
    %v321 = vstv %s316
    %v322 = vmul.f32 %v321, %v320
    %s323 = sld [smem:[#allocation2 + $0x9]]
    %s324 = sld [smem:[#allocation5 + $0x9]]
    %v325 = vstv %s324
    %v326 = vsub.f32 %v74, %v325
    %v327 = vmul.f32 %v326, %v326
    %v328 = vstv %s323
    %v329 = vmul.f32 %v328, %v327
    %v330 = vadd.f32 %v322, %v329
    %v332 = vcombine.high %v330, %v330
    %v334 = vunpack.c.l.s4 1983009808
    %v335 = vunpack.c.0.s8 %v334
    %v336 = vlaneseq
    %v337 = vshrl.u32 %v336, 7
    %v338 = vsub.s32 %v335, %v337
    %v339 = vrot.slane %v330, %v338
    %v341 = vunpack.c.l.s4 1983009808
    %v342 = vunpack.c.0.s8 %v341
    %v343 = vlaneseq
    %v344 = vshrl.u32 %v343, 7
    %v345 = vsub.s32 %v342, %v344
    %v346 = vrot.slane %v332, %v345
    %v347 = vcombine.high %v339, %v339
    %v351 = vsel %vm65, %v339, -1e+30
    %v352 = vsel %vm66, %v347, -1e+30
    %v353 = vsel %vm67, %v346, -1e+30
    %v354 = vmul.f32 %v351, 1.442695
    %v355 = vpow.pop %v354
    %v356 = vmul.f32 %v352, 1.442695
    %v357 = vpow.pop %v356
    %v358 = vmul.f32 %v353, 1.442695
    %v359 = vpow.pop %v358
    %v360 = vsel %vm119, %v355, 0.0
    %v361 = vsel %vm119, %v357, 0.0
    %v362 = vadd.f32 %v360, %v361
    %v363 = vsel %vm119, %v359, 0.0
    %v364 = vadd.f32 %v362, %v363
    %365 = vadd.xlane.f32.xlu0 %v364
    %v366 = vpop.xlane.xlu0 %365
    %s367 = sld [smem:[#allocation7 + $0x4]]
    %v368 = vstv %s367
    %v369 = vmul.f32 %v368, %v366
    %v370 = vmul.f32 %v369, %v71
    %372 = vrot.lane.b32.xlu0 %v370, 4
    %v373 = vpop.permute.xlu0 %372
    %vm375 = vcmask 33824
    %376 = vst.msk [vmem:[#allocation8] sm:$0x3] %vm375, %v373
    %s377 = sld [smem:[#allocation2 + $0xa]]
    %s378 = sld [smem:[#allocation5 + $0xa]]
    %v379 = vstv %s378
    %v380 = vsub.f32 %v72, %v379
    %v381 = vmul.f32 %v380, %v380
    %v382 = vstv %s377
    %v383 = vmul.f32 %v382, %v381
    %s384 = sld [smem:[#allocation2 + $0xb]]
    %s385 = sld [smem:[#allocation5 + $0xb]]
    %v386 = vstv %s385
    %v387 = vsub.f32 %v74, %v386
    %v388 = vmul.f32 %v387, %v387
    %v389 = vstv %s384
    %v390 = vmul.f32 %v389, %v388
    %v391 = vadd.f32 %v383, %v390
    %v393 = vcombine.high %v391, %v391
    %v395 = vunpack.c.l.s4 1983009808
    %v396 = vunpack.c.0.s8 %v395
    %v397 = vlaneseq
    %v398 = vshrl.u32 %v397, 7
    %v399 = vsub.s32 %v396, %v398
    %v400 = vrot.slane %v391, %v399
    %v402 = vunpack.c.l.s4 1983009808
    %v403 = vunpack.c.0.s8 %v402
    %v404 = vlaneseq
    %v405 = vshrl.u32 %v404, 7
    %v406 = vsub.s32 %v403, %v405
    %v407 = vrot.slane %v393, %v406
    %v408 = vcombine.high %v400, %v400
    %v412 = vsel %vm65, %v400, -1e+30
    %v413 = vsel %vm66, %v408, -1e+30
    %v414 = vsel %vm67, %v407, -1e+30
    %v415 = vmul.f32 %v412, 1.442695
    %v416 = vpow.pop %v415
    %v417 = vmul.f32 %v413, 1.442695
    %v418 = vpow.pop %v417
    %v419 = vmul.f32 %v414, 1.442695
    %v420 = vpow.pop %v419
    %v421 = vsel %vm119, %v416, 0.0
    %v422 = vsel %vm119, %v418, 0.0
    %v423 = vadd.f32 %v421, %v422
    %v424 = vsel %vm119, %v420, 0.0
    %v425 = vadd.f32 %v423, %v424
    %426 = vadd.xlane.f32.xlu0 %v425
    %v427 = vpop.xlane.xlu0 %426
    %s428 = sld [smem:[#allocation7 + $0x5]]
    %v429 = vstv %s428
    %v430 = vmul.f32 %v429, %v427
    %v431 = vmul.f32 %v430, %v71
    %433 = vrot.lane.b32.xlu0 %v431, 5
    %v434 = vpop.permute.xlu0 %433
    %vm436 = vcmask 42024
    %437 = vst.msk [vmem:[#allocation8] sm:$0x3] %vm436, %v434
    %s438 = sld [smem:[#allocation2 + $0xc]]
    %s439 = sld [smem:[#allocation5 + $0xc]]
    %v440 = vstv %s439
    %v441 = vsub.f32 %v72, %v440
    %v442 = vmul.f32 %v441, %v441
    %v443 = vstv %s438
    %v444 = vmul.f32 %v443, %v442
    %s445 = sld [smem:[#allocation2 + $0xd]]
    %s446 = sld [smem:[#allocation5 + $0xd]]
    %v447 = vstv %s446
    %v448 = vsub.f32 %v74, %v447
    %v449 = vmul.f32 %v448, %v448
    %v450 = vstv %s445
    %v451 = vmul.f32 %v450, %v449
    %v452 = vadd.f32 %v444, %v451
    %v454 = vcombine.high %v452, %v452
    %v456 = vunpack.c.l.s4 1983009808
    %v457 = vunpack.c.0.s8 %v456
    %v458 = vlaneseq
    %v459 = vshrl.u32 %v458, 7
    %v460 = vsub.s32 %v457, %v459
    %v461 = vrot.slane %v452, %v460
    %v463 = vunpack.c.l.s4 1983009808
    %v464 = vunpack.c.0.s8 %v463
    %v465 = vlaneseq
    %v466 = vshrl.u32 %v465, 7
    %v467 = vsub.s32 %v464, %v466
    %v468 = vrot.slane %v454, %v467
    %v469 = vcombine.high %v461, %v461
    %v473 = vsel %vm65, %v461, -1e+30
    %v474 = vsel %vm66, %v469, -1e+30
    %v475 = vsel %vm67, %v468, -1e+30
    %v476 = vmul.f32 %v473, 1.442695
    %v477 = vpow.pop %v476
    %v478 = vmul.f32 %v474, 1.442695
    %v479 = vpow.pop %v478
    %v480 = vmul.f32 %v475, 1.442695
    %v481 = vpow.pop %v480
    %v482 = vsel %vm119, %v477, 0.0
    %v483 = vsel %vm119, %v479, 0.0
    %v484 = vadd.f32 %v482, %v483
    %v485 = vsel %vm119, %v481, 0.0
    %v486 = vadd.f32 %v484, %v485
    %487 = vadd.xlane.f32.xlu0 %v486
    %v488 = vpop.xlane.xlu0 %487
    %s489 = sld [smem:[#allocation7 + $0x6]]
    %v490 = vstv %s489
    %v491 = vmul.f32 %v490, %v488
    %v492 = vmul.f32 %v491, %v71
    %494 = vrot.lane.b32.xlu0 %v492, 6
    %v495 = vpop.permute.xlu0 %494
    %vm497 = vcmask 50224
    %498 = vst.msk [vmem:[#allocation8] sm:$0x3] %vm497, %v495
    %s499 = sld [smem:[#allocation2 + $0xe]]
    %s500 = sld [smem:[#allocation5 + $0xe]]
    %v501 = vstv %s500
    %v502 = vsub.f32 %v72, %v501
    %v503 = vmul.f32 %v502, %v502
    %v504 = vstv %s499
    %v505 = vmul.f32 %v504, %v503
    %s506 = sld [smem:[#allocation2 + $0xf]]
    %s507 = sld [smem:[#allocation5 + $0xf]]
    %v508 = vstv %s507
    %v509 = vsub.f32 %v74, %v508
    %v510 = vmul.f32 %v509, %v509
    %v511 = vstv %s506
    %v512 = vmul.f32 %v511, %v510
    %v513 = vadd.f32 %v505, %v512
    %v515 = vcombine.high %v513, %v513
    %v517 = vunpack.c.l.s4 1983009808
    %v518 = vunpack.c.0.s8 %v517
    %v519 = vlaneseq
    %v520 = vshrl.u32 %v519, 7
    %v521 = vsub.s32 %v518, %v520
    %v522 = vrot.slane %v513, %v521
    %v524 = vunpack.c.l.s4 1983009808
    %v525 = vunpack.c.0.s8 %v524
    %v526 = vlaneseq
    %v527 = vshrl.u32 %v526, 7
    %v528 = vsub.s32 %v525, %v527
    %v529 = vrot.slane %v515, %v528
    %v530 = vcombine.high %v522, %v522
    %v534 = vsel %vm65, %v522, -1e+30
    %v535 = vsel %vm66, %v530, -1e+30
    %v536 = vsel %vm67, %v529, -1e+30
    %v537 = vmul.f32 %v534, 1.442695
    %v538 = vpow.pop %v537
    %v539 = vmul.f32 %v535, 1.442695
    %v540 = vpow.pop %v539
    %v541 = vmul.f32 %v536, 1.442695
    %v542 = vpow.pop %v541
    %v543 = vsel %vm119, %v538, 0.0
    %v544 = vsel %vm119, %v540, 0.0
    %v545 = vadd.f32 %v543, %v544
    %v546 = vsel %vm119, %v542, 0.0
    %v547 = vadd.f32 %v545, %v546
    %548 = vadd.xlane.f32.xlu0 %v547
    %v549 = vpop.xlane.xlu0 %548
    %s550 = sld [smem:[#allocation7 + $0x7]]
    %v551 = vstv %s550
    %v552 = vmul.f32 %v551, %v549
    %v553 = vmul.f32 %v552, %v71
    %555 = vrot.lane.b32.xlu0 %v553, 7
    %v556 = vpop.permute.xlu0 %555
    %vm558 = vcmask 58424
    %559 = vst.msk [vmem:[#allocation8] sm:$0x3] %vm558, %v556
    // Predicated region
    $region34: #{slayer_weighted_avg.1} parent=1 // pred_check
      _
    $region35: #{slayer_weighted_avg.1} parent=1 // pred_check_branch
      %561 = sbr.rel (0) target = $region37
    $region36: #{slayer_weighted_avg.1} parent=1 // pred_region
      %s563 = ssub.s32 32, 32
      %564 = vsyncadd [#allocation3], %s563
      %s566 = sshll.u32 [#allocation8], 4
      %s567 = int_to_ptr.vmem [resolvable:$true] %s566
      %569 = dma.vmem_to_hbm [thread:$0]  %s567, 32, %s5, [#allocation3]
    $region37: #{slayer_weighted_avg.1} parent=1 // pred_fallthru
      _
    // Predicated region
    $region38: #{slayer_weighted_avg.1} parent=1 // pred_check
      _
    $region39: #{slayer_weighted_avg.1} parent=1 // pred_check_branch
      %571 = sbr.rel (0) target = $region41
    $region40: #{slayer_weighted_avg.1} parent=1 // pred_region
      %572 = dma.done [#allocation3], 32
    $region41: #{slayer_weighted_avg.1} parent=1 // pred_fallthru
      _
    %573 = vsyncpa [#allocation3], 1
    %574 = vsyncpa [#allocation4], 1
    %575 = vsyncpa [#allocation6], 1

</llo_original>
